<compile_context>
chip_gen: v5e
topology: v5e:2x2
jax: 0.10.0
libtpu: 0.0.40
codegen_flags: <defaults>
</compile_context>

<pallas_src>
import math

import jax
import jax.numpy as jnp
from jax.experimental import pallas as pl
from jax.experimental.pallas import tpu as pltpu


def _drop_path_kernel(scale_ref, x_ref, o_ref):
    # scale_ref: VMEM (TB, 1) f32 per-sample scale = mask_b / keep_prob
    # x_ref / o_ref: VMEM (TB, TL) tile
    # Multiply in f32 (v5e has no bf16 VALU) and cast on the store.
    o_ref[...] = (x_ref[...].astype(jnp.float32) * scale_ref[...]).astype(o_ref.dtype)


def _choose_tiles(batch, length, itemsize, target_bytes=2 * 1024 * 1024):
    """Pick (tb, tl) with tb | batch (or == batch), tl | length (or == length).

    Last block dim is a multiple of 128 whenever `length` allows it (lane-dense,
    unmasked stores); one block stays around `target_bytes` so the pipelined
    VMEM footprint (2 bufs in + 2 bufs out) is ~4x that.
    """
    if length % 128 == 0:
        # Largest multiple-of-128 divisor of `length` within the budget
        # (budget assumes at least 8 sublane rows per block).
        max_tl = min(length, max(128, (target_bytes // (8 * itemsize)) // 128 * 128))
        tl = 128
        cand = max_tl
        while cand >= 128:
            if length % cand == 0:
                tl = cand
                break
            cand -= 128
    else:
        # Full-extent last dim: always a legal block shape (stores may be
        # partially masked, which is inherent to such shapes).
        tl = length

    rows_budget = max(1, target_bytes // (tl * itemsize))
    if batch <= rows_budget:
        tb = batch                     # whole batch per block (legal: == full dim)
    else:
        tb = 0
        cand = (rows_budget // 8) * 8  # sublane tile must be a multiple of 8
        while cand >= 8:
            if batch % cand == 0:
                tb = cand
                break
            cand -= 8
        if tb == 0:
            tb = batch                 # fallback: full batch block (always legal)
    return tb, tl


def drop_path(x, drop_prob: float, training: bool, key):
    """Pallas DropPath forward. x: (B, ...) — mask is per leading-batch sample."""
    if drop_prob == 0.0 or not training:
        return x

    keep_prob = 1.0 - drop_prob
    B = x.shape[0]
    L = math.prod(x.shape[1:]) if x.ndim > 1 else 1

    # random_tensor = floor(keep_prob + U[0,1)) -> {0., 1.} per sample; fold the
    # 1/keep_prob division into the per-sample scale.
    u = jax.random.uniform(key, (B,), dtype=jnp.float32)
    mask = jnp.floor(keep_prob + u)
    scale = (mask / keep_prob).reshape(B, 1).astype(jnp.float32)

    x2d = x.reshape(B, L)
    itemsize = jnp.dtype(x.dtype).itemsize
    tb, tl = _choose_tiles(B, L, itemsize)

    out2d = pl.pallas_call(
        _drop_path_kernel,
        out_shape=jax.ShapeDtypeStruct((B, L), x.dtype),
        grid_spec=pltpu.PrefetchScalarGridSpec(
            num_scalar_prefetch=0,
            grid=(B // tb, L // tl),
            in_specs=[
                pl.BlockSpec((tb, 1), lambda i, j: (i, 0)),    # per-sample scale
                pl.BlockSpec((tb, tl), lambda i, j: (i, j)),   # x tile
            ],
            out_specs=pl.BlockSpec((tb, tl), lambda i, j: (i, j)),
        ),
        compiler_params=pltpu.CompilerParams(
            dimension_semantics=("parallel", "parallel"),
        ),
        cost_estimate=pl.CostEstimate(
            flops=B * L,
            transcendentals=0,
            bytes_accessed=2 * B * L * itemsize + B * 4,
        ),
    )(scale, x2d)
    return out2d.reshape(x.shape)


class DropPath:
    """Mirror of the torch module: holds drop_prob and a `training` flag."""

    def __init__(self, drop_prob=None):
        self.drop_prob = drop_prob
        self.training = True

    def __call__(self, x, key):
        p = 0.0 if self.drop_prob is None else float(self.drop_prob)
        return drop_path(x, p, self.training, key)


if __name__ == "__main__":
    key = jax.random.PRNGKey(0)
    kx, kmask = jax.random.split(key)

    # --- Test 1: ViT-ish tensor, lane-dense trailing size (N*D multiple of 128)
    B, N, D = 2, 8, 128
    x = jax.random.normal(kx, (B, N, D), dtype=jnp.float32)
    drop_prob = 0.25
    keep_prob = 1.0 - drop_prob

    module = DropPath(drop_prob=drop_prob)
    module.training = True
    out = jax.block_until_ready(module(x, kmask))

    # Reference (exact torch semantics: x.div(keep_prob) * floor(keep_prob + U))
    u = jax.random.uniform(kmask, (B,), dtype=jnp.float32)
    mask = jnp.floor(keep_prob + u).reshape(B, 1, 1)
    ref = (x / keep_prob) * mask
    assert jnp.allclose(out, ref, atol=1e-6, rtol=1e-6), "mismatch vs reference (test 1)"

    # --- Test 2: trailing size NOT a multiple of 128 (full-extent lane block path)
    B2, N2, D2 = 4, 7, 96
    x2 = jax.random.normal(kx, (B2, N2, D2), dtype=jnp.float32)
    out2 = jax.block_until_ready(drop_path(x2, 0.5, True, kmask))
    u2 = jax.random.uniform(kmask, (B2,), dtype=jnp.float32)
    mask2 = jnp.floor(0.5 + u2).reshape(B2, 1, 1)
    ref2 = (x2 / 0.5) * mask2
    assert jnp.allclose(out2, ref2, atol=1e-6, rtol=1e-6), "mismatch vs reference (test 2)"

    # --- Test 3: bf16 input exercises the in-kernel f32 multiply + cast on store
    x3 = jax.random.normal(kx, (2, 4, 128), dtype=jnp.bfloat16)
    out3 = jax.block_until_ready(drop_path(x3, 0.25, True, kmask))
    u3 = jax.random.uniform(kmask, (2,), dtype=jnp.float32)
    mask3 = jnp.floor(0.75 + u3).reshape(2, 1, 1)
    ref3 = ((x3.astype(jnp.float32) / 0.75) * mask3).astype(jnp.bfloat16)
    assert jnp.allclose(out3.astype(jnp.float32), ref3.astype(jnp.float32),
                        atol=2e-2, rtol=2e-2), "mismatch vs reference (test 3)"

    # --- Eval mode / drop_prob=0 path is an identity (no kernel launch).
    module.training = False
    out_eval = jax.block_until_ready(module(x, kmask))
    assert jnp.allclose(out_eval, x), "eval mode must be identity"

    print("KERNEL_OK")
</pallas_src>

<mosaic_0001>
module attributes {stable_mosaic.version = 11 : i64} {
  func.func @_drop_path_kernel(%arg0: i32, %arg1: i32, %arg2: memref<2x1xf32, #tpu.memory_space<vmem>>, %arg3: memref<2x1024xf32, #tpu.memory_space<vmem>>, %arg4: memref<2x1024xf32, #tpu.memory_space<vmem>>) attributes {dimension_semantics = [#tpu.dimension_semantics<parallel>, #tpu.dimension_semantics<parallel>], iteration_bounds = array<i64: 1, 1>, scalar_prefetch = 0 : i64, scratch_operands = 0 : i64, tpu.core_type = #tpu.core_type<tc>, window_params = [{transform_indices = @transform_0, window_bounds = array<i64: 2, 1>}, {transform_indices = @transform_1, window_bounds = array<i64: 2, 1024>}, {transform_indices = @transform_2, window_bounds = array<i64: 2, 1024>}]} {
    %c0 = arith.constant 0 : index
    %c0_0 = arith.constant 0 : index
    %0 = vector.load %arg3[%c0, %c0_0] : memref<2x1024xf32, #tpu.memory_space<vmem>>, vector<2x1024xf32>
    %c0_1 = arith.constant 0 : index
    %c0_2 = arith.constant 0 : index
    %1 = vector.load %arg2[%c0_1, %c0_2] : memref<2x1xf32, #tpu.memory_space<vmem>>, vector<2x1xf32>
    %2 = vector.broadcast %1 : vector<2x1xf32> to vector<2x1024xf32>
    %3 = arith.mulf %0, %2 : vector<2x1024xf32>
    %c0_3 = arith.constant 0 : index
    %c0_4 = arith.constant 0 : index
    %4 = vector.load %arg4[%c0_3, %c0_4] : memref<2x1024xf32, #tpu.memory_space<vmem>>, vector<2x1024xf32>
    tpu.vector_store %arg4[%c0_3, %c0_4], %3 {strides = array<i32>} : memref<2x1024xf32, #tpu.memory_space<vmem>>, vector<2x1024xf32>,
    return
  }
  func.func @transform_0(%arg0: i32, %arg1: i32) -> (i32, i32) {
    %c0_i32 = arith.constant 0 : i32
    %c0_i32_0 = arith.constant 0 : i32
    return %arg0, %c0_i32 : i32, i32
  }
  func.func @transform_1(%arg0: i32, %arg1: i32) -> (i32, i32) {
    %c0_i32 = arith.constant 0 : i32
    return %arg0, %arg1 : i32, i32
  }
  func.func @transform_2(%arg0: i32, %arg1: i32) -> (i32, i32) {
    %c0_i32 = arith.constant 0 : i32
    return %arg0, %arg1 : i32, i32
  }
}

</mosaic_0001>

<llo_original>
// kernel: tpu_custom_call.1
$region0: #{tpu_custom_call.1}
  #allocation0 [shape = 'u32[]', space=smem, size = 0x4, offset = 0x4, fixed_abs, tag = 'smem constant byte address 0x4 - core index']
  #allocation1 [shape = 'u32[72,128]{1,0:T(1,128)}', space=vmem, size = 0x9000, scoped, tag = 'internal scratch']
  %s0 = inlined_call_operand.vmem [shape: f32[2,1], index: 0, kind: input, shape index: {}]
  %s1 = inlined_call_operand.hbm [shape: f32[2,1024], index: 1, kind: input, shape index: {}]
  %s2 = inlined_call_operand.hbm [shape: f32[2,1024], index: 2, kind: output, shape index: {}]
  %s3 = sld [smem:[#allocation0]]
  $region22: #{tpu_custom_call.1} parent=0
    _
  %s5 = ssub.s32 1, %s3
  %s6 = scalar_select 0, %s5, %s3
  $region1: #{tpu_custom_call.1} parent=0
    #allocation2 [shape = 'u8[8192]{0}', space=vmem, size = 0x2000, scoped, tag = 'input window, operand 1, single buffered']
    #allocation3 [shape = 's32[1]{0}', space=sflag, size = 0x4, scoped, tag = 'scoped memory for tpu_custom_call.1']
    #allocation4 [shape = 's32[1]{0}', space=sflag, size = 0x4, scoped, tag = 'scoped memory for tpu_custom_call.1']
    #allocation5 [shape = 'u8[8192]{0}', space=vmem, size = 0x2000, scoped, tag = 'output window, operand 0, single buffered']
    %7 = vsyncpa [#allocation3], 0
    %8 = vsyncpa [#allocation4], 0
    // Predicated region
    $region2: #{tpu_custom_call.1} parent=1 // pred_check
      _
    $region3: #{tpu_custom_call.1} parent=1 // pred_check_branch
      %10 = sbr.rel (0) target = $region5
    $region4: #{tpu_custom_call.1} parent=1 // pred_region
      _
    $region5: #{tpu_custom_call.1} parent=1 // pred_fallthru
      _
    // Predicated region
    $region6: #{tpu_custom_call.1} parent=1 // pred_check
      _
    $region7: #{tpu_custom_call.1} parent=1 // pred_check_branch
      %12 = sbr.rel (0) target = $region9
    $region8: #{tpu_custom_call.1} parent=1 // pred_region
      %14 = vsyncadd [#allocation3], 0
      %s16 = sshll.u32 %s1, 4
      %s17 = int_to_ptr.hbm [resolvable:$true] %s16
      %s18 = sshll.u32 [#allocation2], 4
      %s19 = int_to_ptr.vmem [resolvable:$true] %s18
      %21 = dma.hbm_to_vmem [thread:$0]  %s17, 256, %s19, [#allocation3]
    $region9: #{tpu_custom_call.1} parent=1 // pred_fallthru
      _
    // Predicated region
    $region10: #{tpu_custom_call.1} parent=1 // pred_check
      _
    $region11: #{tpu_custom_call.1} parent=1 // pred_check_branch
      %23 = sbr.rel (0) target = $region13
    $region12: #{tpu_custom_call.1} parent=1 // pred_region
      %25 = dma.done [#allocation3], 256
    $region13: #{tpu_custom_call.1} parent=1 // pred_fallthru
      _
    %v26 = vld [vmem:[#allocation2] sm:$0xff]
    %v27 = vld [vmem:[#allocation2 + $0x8] sm:$0xff]
    %v28 = vld [vmem:[%s0] sm:$0x3]
    %30 = vset.pattern.permute.xlu0 0
    %31 = vperm.xlu0 %30, %v28
    %v32 = vpop.permute.xlu0 %31
    %v34 = vunpack.c.l.s4 269488144
    %v35 = vunpack.c.0.s8 %v34
    %v36 = vperm.slane %v32, %v35
    %v38 = vmul.f32 %v26, %v36
    %v39 = vmul.f32 %v27, %v36
    %40 = vst [vmem:[#allocation5] sm:$0xff] %v38
    %41 = vst [vmem:[#allocation5 + $0x8] sm:$0xff] %v39
    // Predicated region
    $region14: #{tpu_custom_call.1} parent=1 // pred_check
      _
    $region15: #{tpu_custom_call.1} parent=1 // pred_check_branch
      %43 = sbr.rel (0) target = $region17
    $region16: #{tpu_custom_call.1} parent=1 // pred_region
      %45 = vsyncadd [#allocation4], 0
      %s47 = sshll.u32 [#allocation5], 4
      %s48 = int_to_ptr.vmem [resolvable:$true] %s47
      %s49 = sshll.u32 %s2, 4
      %s50 = int_to_ptr.hbm [resolvable:$true] %s49
      %52 = dma.vmem_to_hbm [thread:$0]  %s48, 256, %s50, [#allocation4]
    $region17: #{tpu_custom_call.1} parent=1 // pred_fallthru
      _
    // Predicated region
    $region18: #{tpu_custom_call.1} parent=1 // pred_check
      _
    $region19: #{tpu_custom_call.1} parent=1 // pred_check_branch
      %54 = sbr.rel (0) target = $region21
    $region20: #{tpu_custom_call.1} parent=1 // pred_region
      %56 = dma.done [#allocation4], 256
    $region21: #{tpu_custom_call.1} parent=1 // pred_fallthru
      _
    %57 = vsyncpa [#allocation3], 1
    %58 = vsyncpa [#allocation4], 1

</llo_original>
